<compile_context>
chip_gen: v7x
topology: tpu7x:2x2x1
jax: 0.10.0
libtpu: 0.0.40
codegen_flags: <defaults>
</compile_context>

<pallas_src>
import math
from typing import NamedTuple, Optional

import jax
import jax.numpy as jnp
from jax.experimental import pallas as pl
from jax.experimental.pallas import tpu as pltpu


# --------------------------------------------------------------------------
# Kernels
# --------------------------------------------------------------------------
def _mirror_kernel_single(x_ref, w_ref, b_ref, o_ref):
    # Whole K panel resident: one MXU matmul + f32 bias, no accumulator.
    o_ref[...] = (jnp.dot(x_ref[...], w_ref[...],
                          preferred_element_type=jnp.float32)
                  + b_ref[...]).astype(o_ref.dtype)


def _mirror_kernel_acc(x_ref, w_ref, b_ref, o_ref, acc_ref):
    k = pl.program_id(2)

    @pl.when(k == 0)
    def _():
        acc_ref[...] = jnp.zeros_like(acc_ref)

    acc_ref[...] += jnp.dot(x_ref[...], w_ref[...],
                            preferred_element_type=jnp.float32)

    @pl.when(k == pl.num_programs(2) - 1)
    def _():
        o_ref[...] = (acc_ref[...] + b_ref[...]).astype(o_ref.dtype)


# --------------------------------------------------------------------------
# Helpers
# --------------------------------------------------------------------------
def _round_up(v: int, m: int) -> int:
    return ((v + m - 1) // m) * m


def _sublane(dtype) -> int:
    itemsize = jnp.dtype(dtype).itemsize
    return max(8, 32 // itemsize)   # 8 for f32, 16 for bf16, 32 for int8/fp8


def _pick_tile(dim: int, target: int, align: int) -> int:
    """Largest multiple of `align` that divides `dim` and is <= max(target, align).
    `dim` must already be a multiple of `align` (we pad beforehand)."""
    assert dim % align == 0
    t = min(max(target, align), dim)
    t -= t % align
    while dim % t != 0:
        t -= align
    return t


def _vmem_capacity_bytes() -> int:
    """Physical VMEM of the current chip generation; conservative fallback."""
    try:
        info = pltpu.get_tpu_info()
        cap = int(getattr(info, "vmem_capacity_bytes"))
        if cap > 0:
            return cap
    except Exception:
        pass
    return 64 * 1024 * 1024   # v7x-sized fallback (safe everywhere)


# --------------------------------------------------------------------------
# One-time parameter fold (cache this per weight update)
# --------------------------------------------------------------------------
class MirrorParams(NamedTuple):
    w_folded: jax.Array    # (in_f_padded, out_f_padded), compute dtype, pre-transposed
    bias_eff: jax.Array    # (1, out_f_padded), float32
    in_features: int
    out_features: int


def prepare_mirror_params(half_weight, half_weight_mirrored, bias=None, *,
                          compute_dtype=None) -> MirrorParams:
    """Fold the MirrorLayer parameters once.  This is a full-weight HBM pass:
    call it at parameter-update time and reuse the result for every forward."""
    out_f, in_f = half_weight.shape
    assert half_weight_mirrored.shape == (out_f, in_f)
    if compute_dtype is None:
        compute_dtype = half_weight.dtype

    w1 = half_weight.astype(jnp.float32)
    w2 = half_weight_mirrored.astype(jnp.float32)
    w_sum = (w1 + w2).T                                        # (in_f, out_f), f32
    bias_eff = 0.5 * (jnp.sum(w1, axis=1) - jnp.sum(w2, axis=1))
    if bias is not None:
        bias_eff = bias_eff + bias.astype(jnp.float32)

    # Zero-pad to lane multiples so the kernel never needs ragged
    # full-extent blocks (zero rows/cols only affect the sliced-off output).
    in_f_p = _round_up(in_f, 128)
    out_f_p = _round_up(out_f, 128)
    if (in_f_p, out_f_p) != (in_f, out_f):
        w_sum = jnp.pad(w_sum, ((0, in_f_p - in_f), (0, out_f_p - out_f)))
        bias_eff = jnp.pad(bias_eff, (0, out_f_p - out_f))

    return MirrorParams(
        w_folded=w_sum.astype(compute_dtype),      # single cast, f32-exact sum
        bias_eff=bias_eff.reshape(1, out_f_p).astype(jnp.float32),
        in_features=in_f,
        out_features=out_f,
    )


# --------------------------------------------------------------------------
# Pallas matmul on the folded parameters
# --------------------------------------------------------------------------
def _weight_spec(block_shape, index_map, weight_buffers):
    if weight_buffers != 2:
        # Deeper buffering on the streaming weight tile (useful on v5e when
        # the profile shows exposed weight DMA).
        return pl.BlockSpec(block_shape, index_map,
                            pipeline_mode=pl.Buffered(weight_buffers))
    return pl.BlockSpec(block_shape, index_map)


def mirror_matmul(x, params: MirrorParams, *,
                  block_b: Optional[int] = None,
                  block_n: Optional[int] = None,
                  block_k: Optional[int] = None,
                  weight_buffers: int = 2):
    """out = x @ (W1+W2).T + folded_bias, using the cached MirrorParams."""
    B, in_f = x.shape
    assert in_f == params.in_features
    in_f_p, out_f_p = params.w_folded.shape
    out_f = params.out_features

    # Both MXU operands in the same dtype (no silent promotion in the kernel).
    compute_dtype = params.w_folded.dtype
    if x.dtype != compute_dtype:
        x = x.astype(compute_dtype)
    out_dtype = compute_dtype
    item = jnp.dtype(compute_dtype).itemsize

    # ---- pad activations (cheap; only when ragged) ----
    sub = _sublane(compute_dtype)
    B_p = _round_up(B, sub)
    if (B_p, in_f_p) != (B, in_f):
        x = jnp.pad(x, ((0, B_p - B), (0, in_f_p - in_f)))

    # ---- default tile targets (sweepable) ----
    if block_b is None:
        block_b = 512
    if block_n is None:
        block_n = 1024 if item <= 2 else 512
    if block_k is None:
        block_k = 1024 if item <= 2 else 512

    # 256-aligned N/K tiles when the dims allow (v6e/v7x MXU is 2x256x256).
    align_n = 256 if out_f_p % 256 == 0 else 128
    align_k = 256 if in_f_p % 256 == 0 else 128

    tm = _pick_tile(B_p, block_b, sub)
    tn = _pick_tile(out_f_p, block_n, align_n)
    tk = _pick_tile(in_f_p, block_k, align_k)

    # ---- generation-aware VMEM budget ----
    vmem_cap = _vmem_capacity_bytes()
    budget = max(int(0.55 * vmem_cap), 16 * 1024 * 1024)

    def _est(tm_, tn_, tk_):
        xb = tm_ * tk_ * item
        wb = tk_ * tn_ * item
        bb = tn_ * 4
        ob = tm_ * tn_ * item
        acc = 0 if tk_ == in_f_p else tm_ * tn_ * 4
        return 2 * (xb + wb + bb + ob) + acc        # double-buffered + scratch

    while _est(tm, tn, tk) > budget:
        if tk > align_k:
            tk = _pick_tile(in_f_p, tk // 2, align_k)
        elif tn > align_n:
            tn = _pick_tile(out_f_p, tn // 2, align_n)
        elif tm > sub:
            tm = _pick_tile(B_p, tm // 2, sub)
        else:
            break

    # ---- megacore: ensure >= 2 blocks along a parallel axis (v7x 2 TCs) ----
    if B_p // tm == 1 and out_f_p // tn == 1 and out_f_p // 2 >= align_n:
        tn = _pick_tile(out_f_p, out_f_p // 2, align_n)

    grid_b = B_p // tm
    grid_n = out_f_p // tn
    grid_k = in_f_p // tk

    est = _est(tm, tn, tk)
    vmem_limit = int(min(max(2 * est, 16 * 1024 * 1024), budget))

    cost = pl.CostEstimate(
        flops=2 * B_p * in_f_p * out_f_p,
        transcendentals=0,
        bytes_accessed=(B_p * in_f_p * item + in_f_p * out_f_p * item
                        + out_f_p * 4 + B_p * out_f_p * item),
    )

    if grid_k == 1:
        # Whole K panel resident: no accumulator, no init/finalize branches.
        grid = (grid_b, grid_n)
        in_specs = [
            pl.BlockSpec((tm, tk), lambda i, j: (i, 0)),            # x tile
            _weight_spec((tk, tn), lambda i, j: (0, j), weight_buffers),
            pl.BlockSpec((1, tn), lambda i, j: (0, j)),             # folded bias
        ]
        out_spec = pl.BlockSpec((tm, tn), lambda i, j: (i, j))
        scratch = []
        kernel = _mirror_kernel_single
        dims = ("parallel", "parallel")
    else:
        grid = (grid_b, grid_n, grid_k)
        in_specs = [
            pl.BlockSpec((tm, tk), lambda i, j, k: (i, k)),          # x tile
            _weight_spec((tk, tn), lambda i, j, k: (k, j), weight_buffers),
            pl.BlockSpec((1, tn), lambda i, j, k: (0, j)),           # folded bias
        ]
        out_spec = pl.BlockSpec((tm, tn), lambda i, j, k: (i, j))
        scratch = [pltpu.VMEM((tm, tn), jnp.float32)]
        kernel = _mirror_kernel_acc
        dims = ("parallel", "parallel", "arbitrary")

    out = pl.pallas_call(
        kernel,
        out_shape=jax.ShapeDtypeStruct((B_p, out_f_p), out_dtype),
        grid_spec=pltpu.PrefetchScalarGridSpec(
            num_scalar_prefetch=0,
            grid=grid,
            in_specs=in_specs,
            out_specs=out_spec,
            scratch_shapes=scratch,
        ),
        compiler_params=pltpu.CompilerParams(
            dimension_semantics=dims,
            vmem_limit_bytes=vmem_limit,
        ),
        cost_estimate=cost,
    )(x, params.w_folded, params.bias_eff)

    if (B_p, out_f_p) != (B, out_f):
        out = out[:B, :out_f]
    return out


def mirror_layer_forward(x, half_weight, half_weight_mirrored, bias=None,
                         **tile_kwargs):
    """Convenience wrapper matching the torch forward signature.
    NOTE: re-runs the parameter fold on every call; for repeated forwards,
    call prepare_mirror_params() once per weight update and use
    mirror_matmul() directly."""
    params = prepare_mirror_params(half_weight, half_weight_mirrored, bias,
                                   compute_dtype=x.dtype)
    return mirror_matmul(x, params, **tile_kwargs)


# --------------------------------------------------------------------------
# Parameter init (mirrors MirrorLayer.reset_parameters) and pure-JAX reference
# --------------------------------------------------------------------------
def init_mirror_params(key, in_features, out_features, dtype=jnp.float32):
    k_w, k_b = jax.random.split(key)
    bound = 1.0 / math.sqrt(in_features)   # kaiming_uniform_(a=sqrt(5)) -> 1/sqrt(fan_in)
    half_weight = jax.random.uniform(
        k_w, (out_features, in_features), dtype=dtype, minval=-bound, maxval=bound)
    half_weight_mirrored = half_weight     # copy_ in reset_parameters
    bias = jax.random.uniform(
        k_b, (out_features,), dtype=dtype, minval=-bound, maxval=bound)
    return half_weight, half_weight_mirrored, bias


def reference_forward(x, w1, w2, bias):
    x = x.astype(jnp.float32)
    w1 = w1.astype(jnp.float32)
    w2 = w2.astype(jnp.float32)
    h1 = (x + 0.5) @ w1.T
    h2 = (x - 0.5) @ w2.T + bias.astype(jnp.float32)
    return h1 + h2


# --------------------------------------------------------------------------
# Tests
# --------------------------------------------------------------------------
if __name__ == "__main__":
    key = jax.random.PRNGKey(0)

    # --- test 1: small shapes, single-pass kernel (K grid collapses to 1) ---
    k_param, k_x, key = jax.random.split(key, 3)
    batch, in_features, out_features = 8, 32, 32
    w1, w2, bias = init_mirror_params(k_param, in_features, out_features)
    x = jax.random.normal(k_x, (batch, in_features), dtype=jnp.float32)

    params = prepare_mirror_params(w1, w2, bias, compute_dtype=jnp.float32)
    out = jax.block_until_ready(mirror_matmul(x, params))
    ref = reference_forward(x, w1, w2, bias)
    assert out.shape == (batch, out_features)
    assert jnp.allclose(out, ref, atol=1e-3, rtol=1e-4), "mismatch (small)"

    # --- test 2: K-accumulation path + megacore N-split, diverged weights ---
    k_param2, k_x2, k_w2b, key = jax.random.split(key, 4)
    batch2, in2, out2 = 256, 512, 384
    w1b, _, bias_b = init_mirror_params(k_param2, in2, out2)
    w2b = w1b + 0.01 * jax.random.normal(k_w2b, w1b.shape, dtype=jnp.float32)
    x2 = jax.random.normal(k_x2, (batch2, in2), dtype=jnp.float32)

    params2 = prepare_mirror_params(w1b, w2b, bias_b, compute_dtype=jnp.float32)
    out2_k = jax.block_until_ready(mirror_matmul(x2, params2, block_k=256))
    ref2 = reference_forward(x2, w1b, w2b, bias_b)
    assert out2_k.shape == (batch2, out2)
    assert jnp.allclose(out2_k, ref2, atol=1e-3, rtol=1e-4), "mismatch (tiled)"

    # --- test 3: ragged dims -> zero-padding path ---
    k_param3, k_x3, key = jax.random.split(key, 3)
    batch3, in3, out3 = 10, 100, 36
    w1c, w2c, bias_c = init_mirror_params(k_param3, in3, out3)
    x3 = jax.random.normal(k_x3, (batch3, in3), dtype=jnp.float32)

    out3_k = jax.block_until_ready(mirror_layer_forward(x3, w1c, w2c, bias_c))
    ref3 = reference_forward(x3, w1c, w2c, bias_c)
    assert out3_k.shape == (batch3, out3)
    assert jnp.allclose(out3_k, ref3, atol=1e-3, rtol=1e-4), "mismatch (ragged)"

    # --- test 4: bf16 operands (single compute dtype, f32 accumulation) ---
    k_param4, k_x4, key = jax.random.split(key, 3)
    batch4, in4, out4 = 64, 256, 256
    w1d, w2d, bias_d = init_mirror_params(k_param4, in4, out4, dtype=jnp.bfloat16)
    x4 = jax.random.normal(k_x4, (batch4, in4), dtype=jnp.bfloat16)

    params4 = prepare_mirror_params(w1d, w2d, bias_d, compute_dtype=jnp.bfloat16)
    out4_k = jax.block_until_ready(mirror_matmul(x4, params4))
    ref4 = reference_forward(x4, w1d, w2d, bias_d)
    assert out4_k.shape == (batch4, out4)
    assert jnp.allclose(out4_k.astype(jnp.float32), ref4, atol=1e-1, rtol=5e-2), \
        "mismatch (bf16)"

    print("KERNEL_OK")
</pallas_src>

<mosaic_0001>
module attributes {stable_mosaic.version = 11 : i64} {
  func.func @_mirror_kernel_single(%arg0: i32, %arg1: i32, %arg2: memref<8x128xf32, #tpu.memory_space<vmem>>, %arg3: memref<128x128xf32, #tpu.memory_space<vmem>>, %arg4: memref<1x128xf32, #tpu.memory_space<vmem>>, %arg5: memref<8x128xf32, #tpu.memory_space<vmem>>) attributes {dimension_semantics = [#tpu.dimension_semantics<parallel>, #tpu.dimension_semantics<parallel>], iteration_bounds = array<i64: 1, 1>, scalar_prefetch = 0 : i64, scratch_operands = 0 : i64, tpu.core_type = #tpu.core_type<tc>, window_params = [{transform_indices = @transform_0, window_bounds = array<i64: 8, 128>}, {transform_indices = @transform_1, window_bounds = array<i64: 128, 128>}, {transform_indices = @transform_2, window_bounds = array<i64: 1, 128>}, {transform_indices = @transform_3, window_bounds = array<i64: 8, 128>}]} {
    %c0 = arith.constant 0 : index
    %c0_0 = arith.constant 0 : index
    %0 = vector.load %arg2[%c0, %c0_0] : memref<8x128xf32, #tpu.memory_space<vmem>>, vector<8x128xf32>
    %c0_1 = arith.constant 0 : index
    %c0_2 = arith.constant 0 : index
    %1 = vector.load %arg3[%c0_1, %c0_2] : memref<128x128xf32, #tpu.memory_space<vmem>>, vector<128x128xf32>
    %cst = arith.constant dense<0.000000e+00> : vector<8x128xf32>
    %2 = tpu.matmul %0, %1, %cst {dimension_numbers = #tpu.dot_dimension_numbers<[1], [0], [0], [1], [0, 0, 1, 1], [], []>} : vector<8x128xf32>, vector<128x128xf32>, vector<8x128xf32> -> vector<8x128xf32>
    %c0_3 = arith.constant 0 : index
    %c0_4 = arith.constant 0 : index
    %3 = vector.load %arg4[%c0_3, %c0_4] : memref<1x128xf32, #tpu.memory_space<vmem>>, vector<1x128xf32>
    %4 = vector.broadcast %3 : vector<1x128xf32> to vector<8x128xf32>
    %5 = arith.addf %2, %4 : vector<8x128xf32>
    %c0_5 = arith.constant 0 : index
    %c0_6 = arith.constant 0 : index
    %6 = vector.load %arg5[%c0_5, %c0_6] : memref<8x128xf32, #tpu.memory_space<vmem>>, vector<8x128xf32>
    tpu.vector_store %arg5[%c0_5, %c0_6], %5 {strides = array<i32>} : memref<8x128xf32, #tpu.memory_space<vmem>>, vector<8x128xf32>,
    return
  }
  func.func @transform_0(%arg0: i32, %arg1: i32) -> (i32, i32) {
    %c0_i32 = arith.constant 0 : i32
    %c0_i32_0 = arith.constant 0 : i32
    return %arg0, %c0_i32 : i32, i32
  }
  func.func @transform_1(%arg0: i32, %arg1: i32) -> (i32, i32) {
    %c0_i32 = arith.constant 0 : i32
    %c0_i32_0 = arith.constant 0 : i32
    return %c0_i32, %arg1 : i32, i32
  }
  func.func @transform_2(%arg0: i32, %arg1: i32) -> (i32, i32) {
    %c0_i32 = arith.constant 0 : i32
    %c0_i32_0 = arith.constant 0 : i32
    return %c0_i32, %arg1 : i32, i32
  }
  func.func @transform_3(%arg0: i32, %arg1: i32) -> (i32, i32) {
    %c0_i32 = arith.constant 0 : i32
    return %arg0, %arg1 : i32, i32
  }
}

</mosaic_0001>

<llo_original>
// kernel: tpu_custom_call.1
$region0: #{tpu_custom_call.1}
  #allocation0 [shape = 'u32[]', space=smem, size = 0x4, offset = 0x4, fixed_abs, tag = 'smem constant byte address 0x4 - core index']
  #allocation1 [shape = 'u32[144,128]{1,0:T(1,128)}', space=vmem, size = 0x12000, scoped, tag = 'internal scratch']
  %s0 = inlined_call_operand.hbm [shape: f32[8,128], index: 0, kind: input, shape index: {}]
  %s1 = inlined_call_operand.hbm [shape: f32[128,128], index: 1, kind: input, shape index: {}]
  %s2 = inlined_call_operand.vmem [shape: f32[1,128], index: 2, kind: input, shape index: {}]
  %s3 = inlined_call_operand.hbm [shape: f32[8,128], index: 3, kind: output, shape index: {}]
  %s4 = sld [smem:[#allocation0]]
  $region30: #{tpu_custom_call.1} parent=0
    _
  %s6 = ssub.s32 1, %s4
  %s7 = scalar_select 0, %s6, %s4
  $region1: #{tpu_custom_call.1} parent=0
    #allocation2 [shape = 'u8[4096]{0}', space=vmem, size = 0x1000, scoped, tag = 'input window, operand 0, single buffered']
    #allocation3 [shape = 's32[1]{0}', space=sflag, size = 0x4, scoped, tag = 'scoped memory for tpu_custom_call.1']
    #allocation4 [shape = 's32[1]{0}', space=sflag, size = 0x4, scoped, tag = 'scoped memory for tpu_custom_call.1']
    #allocation5 [shape = 'u8[65536]{0}', space=vmem, size = 0x10000, scoped, tag = 'input window, operand 1, single buffered']
    #allocation6 [shape = 's32[1]{0}', space=sflag, size = 0x4, scoped, tag = 'scoped memory for tpu_custom_call.1']
    #allocation7 [shape = 'u8[4096]{0}', space=vmem, size = 0x1000, scoped, tag = 'output window, operand 0, single buffered']
    %8 = vsyncpa [#allocation3], 0
    %9 = vsyncpa [#allocation6], 0
    %10 = vsyncpa [#allocation4], 0
    // Predicated region
    $region2: #{tpu_custom_call.1} parent=1 // pred_check
      _
    $region3: #{tpu_custom_call.1} parent=1 // pred_check_branch
      %12 = sbr.rel (0) target = $region5
    $region4: #{tpu_custom_call.1} parent=1 // pred_region
      %s14 = ssub.s32 128, 128
      %15 = vsyncadd [#allocation3], %s14
      %s17 = sshll.u32 [#allocation2], 4
      %s18 = int_to_ptr.vmem [resolvable:$true] %s17
      %20 = dma.hbm_to_vmem [thread:$0]  %s0, 128, %s18, [#allocation3]
    $region5: #{tpu_custom_call.1} parent=1 // pred_fallthru
      _
    // Predicated region
    $region6: #{tpu_custom_call.1} parent=1 // pred_check
      _
    $region7: #{tpu_custom_call.1} parent=1 // pred_check_branch
      %22 = sbr.rel (0) target = $region9
    $region8: #{tpu_custom_call.1} parent=1 // pred_region
      %s24 = ssub.s32 2048, 2048
      %25 = vsyncadd [#allocation6], %s24
      %s26 = sshll.u32 [#allocation5], 4
      %s27 = int_to_ptr.vmem [resolvable:$true] %s26
      %32 = dma.hbm_to_vmem [thread:$0]  %s1, 2048, %s27, [#allocation6], 128, 128, 8
    $region9: #{tpu_custom_call.1} parent=1 // pred_fallthru
      _
    // Predicated region
    $region10: #{tpu_custom_call.1} parent=1 // pred_check
      _
    $region11: #{tpu_custom_call.1} parent=1 // pred_check_branch
      %34 = sbr.rel (0) target = $region13
    $region12: #{tpu_custom_call.1} parent=1 // pred_region
      _
    $region13: #{tpu_custom_call.1} parent=1 // pred_fallthru
      _
    // Predicated region
    $region14: #{tpu_custom_call.1} parent=1 // pred_check
      _
    $region15: #{tpu_custom_call.1} parent=1 // pred_check_branch
      %36 = sbr.rel (0) target = $region17
    $region16: #{tpu_custom_call.1} parent=1 // pred_region
      %37 = dma.done [#allocation3], 128
    $region17: #{tpu_custom_call.1} parent=1 // pred_fallthru
      _
    // Predicated region
    $region18: #{tpu_custom_call.1} parent=1 // pred_check
      _
    $region19: #{tpu_custom_call.1} parent=1 // pred_check_branch
      %39 = sbr.rel (0) target = $region21
    $region20: #{tpu_custom_call.1} parent=1 // pred_region
      %40 = dma.done [#allocation6], 2048
    $region21: #{tpu_custom_call.1} parent=1 // pred_fallthru
      _
    %v41 = vld [vmem:[#allocation2] sm:$0xff]
    %v42 = vld [vmem:[#allocation5] sm:$0xff]
    %v43 = vld [vmem:[#allocation5 + $0x8] sm:$0xff]
    %v44 = vld [vmem:[#allocation5 + $0x10] sm:$0xff]
    %v45 = vld [vmem:[#allocation5 + $0x18] sm:$0xff]
    %v46 = vld [vmem:[#allocation5 + $0x20] sm:$0xff]
    %v47 = vld [vmem:[#allocation5 + $0x28] sm:$0xff]
    %v48 = vld [vmem:[#allocation5 + $0x30] sm:$0xff]
    %v49 = vld [vmem:[#allocation5 + $0x38] sm:$0xff]
    %v50 = vld [vmem:[#allocation5 + $0x40] sm:$0xff]
    %v51 = vld [vmem:[#allocation5 + $0x48] sm:$0xff]
    %v52 = vld [vmem:[#allocation5 + $0x50] sm:$0xff]
    %v53 = vld [vmem:[#allocation5 + $0x58] sm:$0xff]
    %v54 = vld [vmem:[#allocation5 + $0x60] sm:$0xff]
    %v55 = vld [vmem:[#allocation5 + $0x68] sm:$0xff]
    %v56 = vld [vmem:[#allocation5 + $0x70] sm:$0xff]
    %v57 = vld [vmem:[#allocation5 + $0x78] sm:$0xff]
    %v58 = vld [vmem:[%s2] sm:$0x1]
    %v60 = vlaneseq
    %v61 = vshrl.u32 %v60, 7
    %v62 = vsub.s32 0, %v61
    %v63 = vrot.slane %v58, %v62
    %65 = vmatprep.subr.mxu0 0.0
    %66 = vmatpush1.msra.mxu0 %v42
    %67 = vmatprep.subr.mxu0 0.0
    %68 = vmatpush1.msra.mxu0 %v43
    %69 = vmatprep.subr.mxu0 0.0
    %70 = vmatpush1.msra.mxu0 %v44
    %71 = vmatprep.subr.mxu0 0.0
    %72 = vmatpush1.msra.mxu0 %v45
    %73 = vmatprep.subr.mxu0 0.0
    %74 = vmatpush1.msra.mxu0 %v46
    %75 = vmatprep.subr.mxu0 0.0
    %76 = vmatpush1.msra.mxu0 %v47
    %77 = vmatprep.subr.mxu0 0.0
    %78 = vmatpush1.msra.mxu0 %v48
    %79 = vmatprep.subr.mxu0 0.0
    %80 = vmatpush1.msra.mxu0 %v49
    %81 = vmatprep.subr.mxu0 0.0
    %82 = vmatpush1.msra.mxu0 %v50
    %83 = vmatprep.subr.mxu0 0.0
    %84 = vmatpush1.msra.mxu0 %v51
    %85 = vmatprep.subr.mxu0 0.0
    %86 = vmatpush1.msra.mxu0 %v52
    %87 = vmatprep.subr.mxu0 0.0
    %88 = vmatpush1.msra.mxu0 %v53
    %89 = vmatprep.subr.mxu0 0.0
    %90 = vmatpush1.msra.mxu0 %v54
    %91 = vmatprep.subr.mxu0 0.0
    %92 = vmatpush1.msra.mxu0 %v55
    %93 = vmatprep.subr.mxu0 0.0
    %94 = vmatpush1.msra.mxu0 %v56
    %95 = vmatprep.subr.mxu0 0.0
    %96 = vmatpush1.msra.mxu0 %v57
    %97 = vmatprep.subr.mxu0 0.0
    %98 = vmatpush1.msra.mxu0 0.0
    %99 = vmatprep.subr.mxu0 0.0
    %100 = vmatpush1.msra.mxu0 0.0
    %101 = vmatprep.subr.mxu0 0.0
    %102 = vmatpush1.msra.mxu0 0.0
    %103 = vmatprep.subr.mxu0 0.0
    %104 = vmatpush1.msra.mxu0 0.0
    %105 = vmatprep.subr.mxu0 0.0
    %106 = vmatpush1.msra.mxu0 0.0
    %107 = vmatprep.subr.mxu0 0.0
    %108 = vmatpush1.msra.mxu0 0.0
    %109 = vmatprep.subr.mxu0 0.0
    %110 = vmatpush1.msra.mxu0 0.0
    %111 = vmatprep.subr.mxu0 0.0
    %112 = vmatpush1.msra.mxu0 0.0
    %113 = vmatprep.subr.mxu0 0.0
    %114 = vmatpush1.msra.mxu0 0.0
    %115 = vmatprep.subr.mxu0 0.0
    %116 = vmatpush1.msra.mxu0 0.0
    %117 = vmatprep.subr.mxu0 0.0
    %118 = vmatpush1.msra.mxu0 0.0
    %119 = vmatprep.subr.mxu0 0.0
    %120 = vmatpush1.msra.mxu0 0.0
    %121 = vmatprep.subr.mxu0 0.0
    %122 = vmatpush1.msra.mxu0 0.0
    %123 = vmatprep.subr.mxu0 0.0
    %124 = vmatpush1.msra.mxu0 0.0
    %125 = vmatprep.subr.mxu0 0.0
    %126 = vmatpush1.msra.mxu0 0.0
    %127 = vmatprep.subr.mxu0 0.0
    %128 = vmatpush1.msra.mxu0 0.0
    %129 = vmatprep.mubr.f32.mxu0 0.0
    %130 = vmatmul.mubr.f32.gmra.mrb[0].mxu0 %v41
    %v131 = vpop.f32.mrb[0].mxu0
    %v132 = vadd.f32 %v63, %v131
    %v133 = vpop.f32.mrb[0].mxu0
    %134 = vdwg.mxu0
    %135 = vst [vmem:[#allocation7] sm:$0xff] %v132
    // Predicated region
    $region22: #{tpu_custom_call.1} parent=1 // pred_check
      _
    $region23: #{tpu_custom_call.1} parent=1 // pred_check_branch
      %137 = sbr.rel (0) target = $region25
    $region24: #{tpu_custom_call.1} parent=1 // pred_region
      %s139 = ssub.s32 128, 128
      %140 = vsyncadd [#allocation4], %s139
      %s142 = sshll.u32 [#allocation7], 4
      %s143 = int_to_ptr.vmem [resolvable:$true] %s142
      %145 = dma.vmem_to_hbm [thread:$0]  %s143, 128, %s3, [#allocation4]
    $region25: #{tpu_custom_call.1} parent=1 // pred_fallthru
      _
    // Predicated region
    $region26: #{tpu_custom_call.1} parent=1 // pred_check
      _
    $region27: #{tpu_custom_call.1} parent=1 // pred_check_branch
      %147 = sbr.rel (0) target = $region29
    $region28: #{tpu_custom_call.1} parent=1 // pred_region
      %148 = dma.done [#allocation4], 128
    $region29: #{tpu_custom_call.1} parent=1 // pred_fallthru
      _
    %149 = vsyncpa [#allocation3], 1
    %150 = vsyncpa [#allocation6], 1
    %151 = vsyncpa [#allocation4], 1

</llo_original>
